<compile_context>
chip_gen: v5e
topology: v5e:2x2
jax: 0.10.0
libtpu: 0.0.40
codegen_flags: <defaults>
</compile_context>

<pallas_src>
import math

import jax
import jax.numpy as jnp
from jax.experimental import pallas as pl
from jax.experimental.pallas import tpu as pltpu


def _round_up(x: int, m: int) -> int:
    return ((x + m - 1) // m) * m


def _trend_kernel(x_ref, basis_ref, o_ref):
    # One MXU matmul per batch row-tile; f32 accumulation.
    o_ref[...] = jnp.dot(
        x_ref[...], basis_ref[...], preferred_element_type=jnp.float32
    ).astype(o_ref.dtype)


def make_trend_basis(expansion_coefficient_dim: int, target_length: int) -> jnp.ndarray:
    # basis[i, t] = (t / target_length) ** i, shape (E, T); (0/T)**0 == 1 matches torch.
    t = jnp.arange(target_length, dtype=jnp.float32) / float(target_length)
    i = jnp.arange(expansion_coefficient_dim, dtype=jnp.float32)
    return t[None, :] ** i[:, None]


def trend_generator(x: jnp.ndarray, basis: jnp.ndarray, *, max_rows_per_tile: int = 1024) -> jnp.ndarray:
    """x: (..., E) float32, basis: (E, T) float32 -> (..., T) float32."""
    *lead, E = x.shape
    E2, T = basis.shape
    assert E == E2, "x last dim must equal expansion_coefficient_dim"

    B = math.prod(lead) if lead else 1
    x2 = x.reshape(B, E)

    # Pack G consecutive batch rows per kernel row so the kernel's output last dim is
    # G*T (~128 lanes) instead of T (<128) -> dense vector stores, denser loads.
    G = max(1, 128 // T) if T < 128 else 1
    K = G * E            # kernel contraction dim
    N = G * T            # kernel output lane dim

    R = -(-B // G)                                   # grouped rows needed
    TR = min(max_rows_per_tile, _round_up(R, 8))     # rows per grid step (sublane-aligned)
    Rp = _round_up(R, TR)                            # padded grouped rows
    Bp = Rp * G                                      # padded batch rows

    if Bp != B:
        x2 = jnp.pad(x2, ((0, Bp - B), (0, 0)))
    x_rs = x2.reshape(Rp, K)                         # free: contiguous row-major regroup

    # Block-diagonal basis: big_basis[j*E + i, j*T + t] = basis[i, t]
    big_basis = jnp.kron(jnp.eye(G, dtype=basis.dtype), basis)   # (K, N)

    grid = (Rp // TR,)
    out_rs = pl.pallas_call(
        _trend_kernel,
        out_shape=jax.ShapeDtypeStruct((Rp, N), x.dtype),
        grid_spec=pl.GridSpec(
            grid=grid,
            in_specs=[
                pl.BlockSpec((TR, K), lambda i: (i, 0)),  # batch tile (double-buffered)
                pl.BlockSpec((K, N), lambda i: (0, 0)),   # basis: fetched once, resident
            ],
            out_specs=pl.BlockSpec((TR, N), lambda i: (i, 0)),
        ),
        compiler_params=pltpu.CompilerParams(
            dimension_semantics=("parallel",),            # megacore sharding on v7x
            vmem_limit_bytes=32 * 1024 * 1024,            # safe on v5e/v6e/v7x; >> working set
        ),
    )(x_rs, big_basis)

    out = out_rs.reshape(Bp, T)[:B]                  # undo free regroup, drop padding
    return out.reshape(*lead, T)


if __name__ == "__main__":
    expansion_coefficient_dim = 4   # E
    target_length = 16              # T
    batch = 8                       # small shape consistent with the module

    key = jax.random.PRNGKey(0)
    x = jax.random.normal(key, (batch, expansion_coefficient_dim), dtype=jnp.float32)
    basis = make_trend_basis(expansion_coefficient_dim, target_length)

    out = jax.block_until_ready(trend_generator(x, basis))
    ref = jnp.dot(x, basis, precision=jax.lax.Precision.HIGHEST)
    assert out.shape == (batch, target_length)
    assert jnp.allclose(out, ref, atol=1e-5, rtol=1e-5)

    # Second check: exercise multi-tile grid + batch padding (still tiny in absolute size).
    big_batch = 9000
    xb = jax.random.normal(jax.random.PRNGKey(1), (big_batch, expansion_coefficient_dim),
                           dtype=jnp.float32)
    outb = jax.block_until_ready(trend_generator(xb, basis))
    refb = jnp.dot(xb, basis, precision=jax.lax.Precision.HIGHEST)
    assert outb.shape == (big_batch, target_length)
    assert jnp.allclose(outb, refb, atol=1e-5, rtol=1e-5)

    print("KERNEL_OK")
</pallas_src>

<mosaic_0001>
module attributes {stable_mosaic.version = 11 : i64} {
  func.func @_trend_kernel(%arg0: i32, %arg1: memref<8x32xf32, #tpu.memory_space<vmem>>, %arg2: memref<32x128xf32, #tpu.memory_space<vmem>>, %arg3: memref<8x128xf32, #tpu.memory_space<vmem>>) attributes {dimension_semantics = [#tpu.dimension_semantics<parallel>], iteration_bounds = array<i64: 1>, scalar_prefetch = 0 : i64, scratch_operands = 0 : i64, tpu.core_type = #tpu.core_type<tc>, window_params = [{transform_indices = @transform_0, window_bounds = array<i64: 8, 32>}, {pipeline_mode = #tpu.pipeline_mode<synchronous>, transform_indices = @transform_1, window_bounds = array<i64: 32, 128>}, {transform_indices = @transform_2, window_bounds = array<i64: 8, 128>}]} {
    %c0 = arith.constant 0 : index
    %c0_0 = arith.constant 0 : index
    %0 = vector.load %arg1[%c0, %c0_0] : memref<8x32xf32, #tpu.memory_space<vmem>>, vector<8x32xf32>
    %c0_1 = arith.constant 0 : index
    %c0_2 = arith.constant 0 : index
    %1 = vector.load %arg2[%c0_1, %c0_2] : memref<32x128xf32, #tpu.memory_space<vmem>>, vector<32x128xf32>
    %cst = arith.constant dense<0.000000e+00> : vector<8x128xf32>
    %2 = tpu.matmul %0, %1, %cst {dimension_numbers = #tpu.dot_dimension_numbers<[1], [0], [0], [1], [0, 0, 1, 1], [], []>} : vector<8x32xf32>, vector<32x128xf32>, vector<8x128xf32> -> vector<8x128xf32>
    %c0_3 = arith.constant 0 : index
    %c0_4 = arith.constant 0 : index
    %3 = vector.load %arg3[%c0_3, %c0_4] : memref<8x128xf32, #tpu.memory_space<vmem>>, vector<8x128xf32>
    tpu.vector_store %arg3[%c0_3, %c0_4], %2 {strides = array<i32>} : memref<8x128xf32, #tpu.memory_space<vmem>>, vector<8x128xf32>,
    return
  }
  func.func @transform_0(%arg0: i32) -> (i32, i32) {
    %c0_i32 = arith.constant 0 : i32
    %c0_i32_0 = arith.constant 0 : i32
    return %arg0, %c0_i32 : i32, i32
  }
  func.func @transform_1(%arg0: i32) -> (i32, i32) {
    %c0_i32 = arith.constant 0 : i32
    %c0_i32_0 = arith.constant 0 : i32
    %c0_i32_1 = arith.constant 0 : i32
    return %c0_i32, %c0_i32_0 : i32, i32
  }
  func.func @transform_2(%arg0: i32) -> (i32, i32) {
    %c0_i32 = arith.constant 0 : i32
    %c0_i32_0 = arith.constant 0 : i32
    return %arg0, %c0_i32 : i32, i32
  }
}

</mosaic_0001>

<llo_original>
// kernel: tpu_custom_call.1
$region0: #{tpu_custom_call.1}
  #allocation0 [shape = 'u32[]', space=smem, size = 0x4, offset = 0x4, fixed_abs, tag = 'smem constant byte address 0x4 - core index']
  #allocation1 [shape = 'u32[72,128]{1,0:T(1,128)}', space=vmem, size = 0x9000, scoped, tag = 'internal scratch']
  %s0 = inlined_call_operand.hbm [shape: f32[8,32], index: 0, kind: input, shape index: {}]
  %s1 = inlined_call_operand.hbm [shape: f32[32,128], index: 1, kind: input, shape index: {}]
  %s2 = inlined_call_operand.hbm [shape: f32[8,128], index: 2, kind: output, shape index: {}]
  %s3 = sld [smem:[#allocation0]]
  $region26: #{tpu_custom_call.1} parent=0
    _
  %s5 = ssub.s32 1, %s3
  %s6 = scalar_select 0, %s5, %s3
  $region1: #{tpu_custom_call.1} parent=0
    #allocation2 [shape = 'u8[4096]{0}', space=vmem, size = 0x1000, scoped, tag = 'input window, operand 0, single buffered']
    #allocation3 [shape = 's32[1]{0}', space=sflag, size = 0x4, scoped, tag = 'scoped memory for tpu_custom_call.1']
    #allocation4 [shape = 's32[1]{0}', space=sflag, size = 0x4, scoped, tag = 'scoped memory for tpu_custom_call.1']
    #allocation5 [shape = 'u8[16384]{0}', space=vmem, size = 0x4000, scoped, tag = 'input window, operand 1, single buffered']
    #allocation6 [shape = 's32[1]{0}', space=sflag, size = 0x4, scoped, tag = 'scoped memory for tpu_custom_call.1']
    #allocation7 [shape = 'u8[4096]{0}', space=vmem, size = 0x1000, scoped, tag = 'output window, operand 0, single buffered']
    %7 = vsyncpa [#allocation3], 0
    %8 = vsyncpa [#allocation6], 0
    %9 = vsyncpa [#allocation4], 0
    // Predicated region
    $region2: #{tpu_custom_call.1} parent=1 // pred_check
      _
    $region3: #{tpu_custom_call.1} parent=1 // pred_check_branch
      %11 = sbr.rel (0) target = $region5
    $region4: #{tpu_custom_call.1} parent=1 // pred_region
      %13 = vsyncadd [#allocation3], 0
      %s15 = sshll.u32 %s0, 4
      %s16 = int_to_ptr.hbm [resolvable:$true] %s15
      %s17 = sshll.u32 [#allocation2], 4
      %s18 = int_to_ptr.vmem [resolvable:$true] %s17
      %20 = dma.hbm_to_vmem [thread:$0]  %s16, 128, %s18, [#allocation3]
    $region5: #{tpu_custom_call.1} parent=1 // pred_fallthru
      _
    // Predicated region
    $region6: #{tpu_custom_call.1} parent=1 // pred_check
      _
    $region7: #{tpu_custom_call.1} parent=1 // pred_check_branch
      %22 = sbr.rel (0) target = $region9
    $region8: #{tpu_custom_call.1} parent=1 // pred_region
      %24 = vsyncadd [#allocation6], 0
      %s25 = sshll.u32 %s1, 4
      %s26 = int_to_ptr.hbm [resolvable:$true] %s25
      %s27 = sshll.u32 [#allocation5], 4
      %s28 = int_to_ptr.vmem [resolvable:$true] %s27
      %33 = dma.hbm_to_vmem [thread:$0]  %s26, 512, %s28, [#allocation6], 128, 128, 8
    $region9: #{tpu_custom_call.1} parent=1 // pred_fallthru
      _
    // Predicated region
    $region10: #{tpu_custom_call.1} parent=1 // pred_check
      _
    $region11: #{tpu_custom_call.1} parent=1 // pred_check_branch
      %35 = sbr.rel (0) target = $region13
    $region12: #{tpu_custom_call.1} parent=1 // pred_region
      %37 = dma.done [#allocation3], 128
    $region13: #{tpu_custom_call.1} parent=1 // pred_fallthru
      _
    // Predicated region
    $region14: #{tpu_custom_call.1} parent=1 // pred_check
      _
    $region15: #{tpu_custom_call.1} parent=1 // pred_check_branch
      %39 = sbr.rel (0) target = $region17
    $region16: #{tpu_custom_call.1} parent=1 // pred_region
      %41 = dma.done [#allocation6], 512
    $region17: #{tpu_custom_call.1} parent=1 // pred_fallthru
      _
    %v42 = vld [vmem:[#allocation2] sm:$0xff]
    %v43 = vld [vmem:[#allocation5] sm:$0xff]
    %v44 = vld [vmem:[#allocation5 + $0x8] sm:$0xff]
    %v45 = vld [vmem:[#allocation5 + $0x10] sm:$0xff]
    %v46 = vld [vmem:[#allocation5 + $0x18] sm:$0xff]
    %vm47 = vcmask 261120
    %v49 = vsel %vm47, %v42, 0
    %51 = vmatpush.msra.mxu0 0.0
    %52 = vmatpush.msra.mxu0 0.0
    %53 = vmatpush.msra.mxu0 0.0
    %54 = vmatpush.msra.mxu0 0.0
    %55 = vmatpush.msra.mxu0 0.0
    %56 = vmatpush.msra.mxu0 0.0
    %57 = vmatpush.msra.mxu0 0.0
    %58 = vmatpush.msra.mxu0 0.0
    %59 = vmatpush.msra.mxu0 0.0
    %60 = vmatpush.msra.mxu0 0.0
    %61 = vmatpush.msra.mxu0 0.0
    %62 = vmatpush.msra.mxu0 0.0
    %63 = vmatpush.msra.mxu0 %v46
    %64 = vmatpush.msra.mxu0 %v45
    %65 = vmatpush.msra.mxu0 %v44
    %66 = vmatpush.msra.mxu0 %v43
    %67 = vmatmul.f32.gmra.mxu0 %v49
    %v68 = vpop.f32.mrf.mxu0
    %v69 = vadd.f32 0.0, %v68
    %70 = vdwg.mxu0
    %71 = vst [vmem:[#allocation7] sm:$0xff] %v69
    // Predicated region
    $region18: #{tpu_custom_call.1} parent=1 // pred_check
      _
    $region19: #{tpu_custom_call.1} parent=1 // pred_check_branch
      %73 = sbr.rel (0) target = $region21
    $region20: #{tpu_custom_call.1} parent=1 // pred_region
      %75 = vsyncadd [#allocation4], 0
      %s77 = sshll.u32 [#allocation7], 4
      %s78 = int_to_ptr.vmem [resolvable:$true] %s77
      %s79 = sshll.u32 %s2, 4
      %s80 = int_to_ptr.hbm [resolvable:$true] %s79
      %82 = dma.vmem_to_hbm [thread:$0]  %s78, 128, %s80, [#allocation4]
    $region21: #{tpu_custom_call.1} parent=1 // pred_fallthru
      _
    // Predicated region
    $region22: #{tpu_custom_call.1} parent=1 // pred_check
      _
    $region23: #{tpu_custom_call.1} parent=1 // pred_check_branch
      %84 = sbr.rel (0) target = $region25
    $region24: #{tpu_custom_call.1} parent=1 // pred_region
      %86 = dma.done [#allocation4], 128
    $region25: #{tpu_custom_call.1} parent=1 // pred_fallthru
      _
    %87 = vsyncpa [#allocation3], 1
    %88 = vsyncpa [#allocation6], 1
    %89 = vsyncpa [#allocation4], 1

</llo_original>
